<compile_context>
chip_gen: v7x
topology: tpu7x:2x2x1
jax: 0.10.0
libtpu: 0.0.40
codegen_flags: <defaults>
</compile_context>

<pallas_src>
import functools

import jax
import jax.numpy as jnp
from jax.experimental import pallas as pl
from jax.experimental.pallas import tpu as pltpu


# ---------------------------------------------------------------------------
# Kernel
# ---------------------------------------------------------------------------
def _sam_loss_kernel(low_ref, rowmat_ref, colt_ref, gt_ref, out_ref,
                     st_acc, s_acc, t_acc, foc_acc, pt_acc, p_acc, *, alpha):
    """Grid = (mask, row_tile).

    low_ref    : (1, h, w)   bf16  low-res SAM mask logits (resident per mask)
    rowmat_ref : (tr, h)     bf16  bilinear row-interp weights for this row tile
    colt_ref   : (w, W)      bf16  bilinear col-interp weights (resident)
    gt_ref     : (1, tr, W)  bf16  binary gt tile
    out_ref    : (1, 8, 128) f32   per-mask sums broadcast into rows 0..5:
                                   [sum(s*t), sum(s), sum(t), sum(focal),
                                    sum(pred*t), sum(pred)]
    *_acc      : (tr, 1)     f32   per-row partial-sum accumulators
    """
    k = pl.program_id(1)

    @pl.when(k == 0)
    def _init():
        for acc in (st_acc, s_acc, t_acc, foc_acc, pt_acc, p_acc):
            acc[...] = jnp.zeros_like(acc)

    # Fused bilinear upsample: (tr, h) @ (h, w) @ (w, W) on the MXU.
    rows = jnp.dot(rowmat_ref[...], low_ref[0],
                   preferred_element_type=jnp.float32)           # (tr, w) f32
    x = jnp.dot(rows.astype(jnp.bfloat16), colt_ref[...],
                preferred_element_type=jnp.float32)              # (tr, W) logits

    g = gt_ref[0].astype(jnp.float32)                            # (tr, W)
    s = jax.nn.sigmoid(x)          # module quirk: losses consume probabilities
    one_m_g = 1.0 - g
    sg = s * g

    def _rsum(v):                                                # (tr, W) -> (tr, 1)
        return jnp.sum(v, axis=-1, keepdims=True)

    # dice partial sums
    st_acc[...] += _rsum(sg)
    s_acc[...] += _rsum(s)
    t_acc[...] += _rsum(g)

    # sigmoid-CE focal loss (reference quirk: BCE-with-logits applied to the
    # already-sigmoided probabilities).  s in [0,1] => max(s,0)=s, |s|=s, and
    # gamma=2 is an explicit square (no float pow -> no extra EUP work).
    bce = s * one_m_g + jnp.log1p(jnp.exp(-s))
    q = 1.0 - (sg + (1.0 - s) * one_m_g)                         # 1 - p_t
    alpha_t = alpha * g + (1.0 - alpha) * one_m_g
    foc_acc[...] += _rsum(alpha_t * (bce * (q * q)))

    # thresholded-mask IoU partial sums
    pred = (s >= 0.5).astype(jnp.float32)
    pt_acc[...] += _rsum(pred * g)
    p_acc[...] += _rsum(pred)

    @pl.when(k == pl.num_programs(1) - 1)
    def _finalize():
        row_id = jax.lax.broadcasted_iota(jnp.int32, (8, 128), 0)
        block = jnp.zeros((8, 128), jnp.float32)
        for i, acc in enumerate((st_acc, s_acc, t_acc, foc_acc, pt_acc, p_acc)):
            block = jnp.where(row_id == i, jnp.sum(acc[...]), block)
        out_ref[0] = block


# ---------------------------------------------------------------------------
# Helpers
# ---------------------------------------------------------------------------
def _bilinear_matrix(src, dst):
    """Exact linear operator of jax.image.resize(..., method='bilinear') along one axis.

    Returns A of shape (dst, src) with resize(v) == A @ v for 1-D v.
    """
    eye = jnp.eye(src, dtype=jnp.float32)
    cols = jax.vmap(lambda e: jax.image.resize(e, (dst,), method="bilinear"))(eye)
    return cols.T  # (dst, src)


def _pick_row_tile(H, W, max_tile_pixels):
    """Largest row tile (multiple of 8, divisor of H) with tr * W <= max_tile_pixels."""
    for tr in (512, 256, 128, 64, 32, 16, 8):
        if H % tr == 0 and tr * W <= max_tile_pixels:
            return tr
    return H  # small images: full height (full-dim block is always legal)


# ---------------------------------------------------------------------------
# Wrapper
# ---------------------------------------------------------------------------
def sam_criterion_pallas(pred_masks, gt_masks, ious, ori_shapes, image_size,
                         max_tile_pixels=256 * 1024):
    """Pallas implementation of SAMCriterion.forward.

    pred_masks: list of [N_i, h, w] float low-res mask logits
    gt_masks:   list of [N_i, image_size, image_size] {0,1} masks
    ious:       list of [N_i] predicted IoU scores
    ori_shapes: list of [2] int arrays (assumed == (image_size, image_size) here)
    """
    num_masks = sum(int(pm.shape[0]) for pm in pred_masks)

    low = jnp.concatenate(list(pred_masks), axis=0).astype(jnp.bfloat16)   # (M, h, w)
    gt = jnp.concatenate(list(gt_masks), axis=0).astype(jnp.bfloat16)      # (M, H, W)
    iou_pred = jnp.concatenate([i.reshape(-1) for i in ious],
                               axis=0).astype(jnp.float32)                 # (M,)

    M, h, w = low.shape
    H = W = int(image_size)
    assert gt.shape == (M, H, W), "gt masks must be (N, image_size, image_size)"
    # TODO(synk): crop to the pre-padded size and resize to ori_shape for non-square
    # ori_shapes (data-dependent spatial shapes); here ori_shape == image_size.

    # Bilinear interpolation operators of jax.image.resize / F.interpolate(align_corners=False)
    row_mat = _bilinear_matrix(h, H).astype(jnp.bfloat16)        # (H, h)
    col_mat_t = _bilinear_matrix(w, W).astype(jnp.bfloat16).T    # (w, W)

    tr = _pick_row_tile(H, W, max_tile_pixels)
    grid = (M, H // tr)

    sums = pl.pallas_call(
        functools.partial(_sam_loss_kernel, alpha=0.25),
        out_shape=jax.ShapeDtypeStruct((M, 8, 128), jnp.float32),
        grid_spec=pltpu.PrefetchScalarGridSpec(
            num_scalar_prefetch=0,
            grid=grid,
            in_specs=[
                pl.BlockSpec((1, h, w), lambda m, k: (m, 0, 0)),     # low-res logits
                pl.BlockSpec((tr, h), lambda m, k: (k, 0)),          # row interp tile
                pl.BlockSpec((w, W), lambda m, k: (0, 0)),           # col interp (resident)
                pl.BlockSpec((1, tr, W), lambda m, k: (m, k, 0)),    # gt tile
            ],
            out_specs=pl.BlockSpec((1, 8, 128), lambda m, k: (m, 0, 0)),
            scratch_shapes=[pltpu.VMEM((tr, 1), jnp.float32) for _ in range(6)],
        ),
        compiler_params=pltpu.CompilerParams(
            dimension_semantics=("parallel", "arbitrary"),
            vmem_limit_bytes=32 * 1024 * 1024,
        ),
    )(low, row_mat, col_mat_t, gt)

    # Tiny per-mask epilogue in plain JAX.
    res = sums[:, :6, 0]                                   # (M, 6)
    st, s_sum, t_sum, foc, pt, p_sum = (res[:, i] for i in range(6))
    total_pixels = float(H * W)

    dice = 1.0 - (2.0 * st + 1.0) / (s_sum + t_sum + 1.0)
    focal = foc / total_pixels
    union = p_sum + t_sum - pt
    batch_iou = pt / (union + 1e-7)
    sq_err = (iou_pred - batch_iou) ** 2

    loss_dice = dice.sum() / num_masks
    loss_focal = focal.sum() / num_masks
    loss_iou = sq_err.sum() / num_masks
    total = 20.0 * loss_focal + loss_dice + loss_iou
    return {"total_loss": total, "loss_focal": loss_focal,
            "loss_dice": loss_dice, "loss_iou": loss_iou}


# ---------------------------------------------------------------------------
# Pure-JAX references (for correctness checking)
# ---------------------------------------------------------------------------
def sam_criterion_reference(pred_masks, gt_masks, ious, ori_shapes, image_size,
                            match_kernel_precision=False):
    """Mirror of the PyTorch module.

    match_kernel_precision=True reproduces the kernel's bf16 upsample path
    (same quantized inputs/weights/intermediate -> near bit-identical);
    False uses full-f32 jax.image.resize (faithful reference).
    """
    num_masks = sum(int(pm.shape[0]) for pm in pred_masks)
    H = W = int(image_size)
    ld = lf = li = 0.0
    for pm, gm, iou, _ori in zip(pred_masks, gt_masks, ious, ori_shapes):
        n, h, w = pm.shape
        if match_kernel_precision:
            a_r = _bilinear_matrix(h, H).astype(jnp.bfloat16).astype(jnp.float32)  # (H, h)
            a_c = _bilinear_matrix(w, W).astype(jnp.bfloat16).astype(jnp.float32)  # (W, w)
            x = pm.astype(jnp.bfloat16).astype(jnp.float32)
            rows = jnp.einsum("rh,nhw->nrw", a_r, x)
            rows = rows.astype(jnp.bfloat16).astype(jnp.float32)
            up = jnp.einsum("nrw,cw->nrc", rows, a_c)                               # (n, H, W)
        else:
            up = jax.image.resize(pm.astype(jnp.float32), (n, H, W), method="bilinear")
        s = jax.nn.sigmoid(up).reshape(n, -1)
        t = gm.reshape(n, -1).astype(jnp.float32)
        # dice
        num = 2.0 * (s * t).sum(-1)
        den = s.sum(-1) + t.sum(-1)
        ld = ld + (1.0 - (num + 1.0) / (den + 1.0)).sum() / num_masks
        # focal (module quirk: BCE-with-logits on probabilities)
        bce = jnp.maximum(s, 0.0) - s * t + jnp.log1p(jnp.exp(-jnp.abs(s)))
        p_t = s * t + (1.0 - s) * (1.0 - t)
        loss = (0.25 * t + 0.75 * (1.0 - t)) * bce * (1.0 - p_t) ** 2
        lf = lf + loss.mean(1).sum() / num_masks
        # iou mse
        pred = (s >= 0.5).astype(jnp.float32)
        inter = (pred * t).sum(1)
        union = pred.sum(1) + t.sum(1) - inter
        biou = inter / (union + 1e-7)
        li = li + ((iou.reshape(-1).astype(jnp.float32) - biou) ** 2).sum() / num_masks
    total = 20.0 * lf + ld + li
    return {"total_loss": total, "loss_focal": lf, "loss_dice": ld, "loss_iou": li}


# ---------------------------------------------------------------------------
# Test
# ---------------------------------------------------------------------------
if __name__ == "__main__":
    image_size = 32
    batch = 2          # number of images (list length)
    n_masks = 2        # masks per image
    low_res = 8        # low-res SAM mask size

    key = jax.random.PRNGKey(0)
    keys = jax.random.split(key, 3 * batch)
    pred_masks, gt_masks, ious, ori_shapes = [], [], [], []
    for b in range(batch):
        kp, kg, ki = keys[3 * b], keys[3 * b + 1], keys[3 * b + 2]
        pred_masks.append(2.0 * jax.random.normal(kp, (n_masks, low_res, low_res),
                                                  jnp.float32))
        gt_masks.append((jax.random.uniform(kg, (n_masks, image_size, image_size))
                         > 0.5).astype(jnp.int32))
        ious.append(jax.random.uniform(ki, (n_masks,), jnp.float32))
        ori_shapes.append(jnp.array([image_size, image_size], jnp.int32))

    out = sam_criterion_pallas(pred_masks, gt_masks, ious, ori_shapes, image_size)
    jax.block_until_ready(out["total_loss"])

    ref_q = sam_criterion_reference(pred_masks, gt_masks, ious, ori_shapes, image_size,
                                    match_kernel_precision=True)
    ref_f = sam_criterion_reference(pred_masks, gt_masks, ious, ori_shapes, image_size,
                                    match_kernel_precision=False)

    # vs precision-matched (bf16 upsample) reference: dice/focal are smooth (tight),
    # the thresholded-IoU term can move by a pixel under 1-ulp differences (looser).
    for name, tol in (("loss_dice", 2e-3), ("loss_focal", 2e-3),
                      ("loss_iou", 2e-2), ("total_loss", 2e-2)):
        assert jnp.allclose(out[name], ref_q[name], rtol=tol, atol=tol), (
            name, out[name], ref_q[name])

    # vs full-f32 jax.image.resize reference: bounds the bf16-upsample quantization impact.
    for name in ("total_loss", "loss_focal", "loss_dice", "loss_iou"):
        assert jnp.allclose(out[name], ref_f[name], rtol=5e-2, atol=5e-2), (
            name, out[name], ref_f[name])

    print("KERNEL_OK")
</pallas_src>

<mosaic_0001>
module attributes {stable_mosaic.version = 11 : i64} {
  func.func @_sam_loss_kernel(%arg0: i32, %arg1: i32, %arg2: memref<1x8x8xbf16, #tpu.memory_space<vmem>>, %arg3: memref<32x8xbf16, #tpu.memory_space<vmem>>, %arg4: memref<8x32xbf16, #tpu.memory_space<vmem>>, %arg5: memref<1x32x32xbf16, #tpu.memory_space<vmem>>, %arg6: memref<1x8x128xf32, #tpu.memory_space<vmem>>, %arg7: memref<32x1xf32, #tpu.memory_space<vmem>>, %arg8: memref<32x1xf32, #tpu.memory_space<vmem>>, %arg9: memref<32x1xf32, #tpu.memory_space<vmem>>, %arg10: memref<32x1xf32, #tpu.memory_space<vmem>>, %arg11: memref<32x1xf32, #tpu.memory_space<vmem>>, %arg12: memref<32x1xf32, #tpu.memory_space<vmem>>) attributes {dimension_semantics = [#tpu.dimension_semantics<parallel>, #tpu.dimension_semantics<arbitrary>], iteration_bounds = array<i64: 4, 1>, scalar_prefetch = 0 : i64, scratch_operands = 6 : i64, tpu.core_type = #tpu.core_type<tc>, window_params = [{transform_indices = @transform_0, window_bounds = array<i64: 1, 8, 8>}, {transform_indices = @transform_1, window_bounds = array<i64: 32, 8>}, {pipeline_mode = #tpu.pipeline_mode<synchronous>, transform_indices = @transform_2, window_bounds = array<i64: 8, 32>}, {transform_indices = @transform_3, window_bounds = array<i64: 1, 32, 32>}, {transform_indices = @transform_4, window_bounds = array<i64: 1, 8, 128>}]} {
    %c0_i32 = arith.constant 0 : i32
    %0 = arith.cmpi eq, %arg1, %c0_i32 : i32
    %1 = arith.extui %0 : i1 to i32
    %c0_i32_0 = arith.constant 0 : i32
    %2 = arith.cmpi ne, %1, %c0_i32_0 : i32
    scf.if %2 {
      %cst_51 = arith.constant 0.000000e+00 : f32
      %79 = vector.broadcast %cst_51 : f32 to vector<32x1xf32>
      %c0_52 = arith.constant 0 : index
      %c0_53 = arith.constant 0 : index
      %80 = vector.load %arg7[%c0_52, %c0_53] : memref<32x1xf32, #tpu.memory_space<vmem>>, vector<32x1xf32>
      tpu.vector_store %arg7[%c0_52, %c0_53], %79 {strides = array<i32>} : memref<32x1xf32, #tpu.memory_space<vmem>>, vector<32x1xf32>,
      %cst_54 = arith.constant 0.000000e+00 : f32
      %81 = vector.broadcast %cst_54 : f32 to vector<32x1xf32>
      %c0_55 = arith.constant 0 : index
      %c0_56 = arith.constant 0 : index
      %82 = vector.load %arg8[%c0_55, %c0_56] : memref<32x1xf32, #tpu.memory_space<vmem>>, vector<32x1xf32>
      tpu.vector_store %arg8[%c0_55, %c0_56], %81 {strides = array<i32>} : memref<32x1xf32, #tpu.memory_space<vmem>>, vector<32x1xf32>,
      %cst_57 = arith.constant 0.000000e+00 : f32
      %83 = vector.broadcast %cst_57 : f32 to vector<32x1xf32>
      %c0_58 = arith.constant 0 : index
      %c0_59 = arith.constant 0 : index
      %84 = vector.load %arg9[%c0_58, %c0_59] : memref<32x1xf32, #tpu.memory_space<vmem>>, vector<32x1xf32>
      tpu.vector_store %arg9[%c0_58, %c0_59], %83 {strides = array<i32>} : memref<32x1xf32, #tpu.memory_space<vmem>>, vector<32x1xf32>,
      %cst_60 = arith.constant 0.000000e+00 : f32
      %85 = vector.broadcast %cst_60 : f32 to vector<32x1xf32>
      %c0_61 = arith.constant 0 : index
      %c0_62 = arith.constant 0 : index
      %86 = vector.load %arg10[%c0_61, %c0_62] : memref<32x1xf32, #tpu.memory_space<vmem>>, vector<32x1xf32>
      tpu.vector_store %arg10[%c0_61, %c0_62], %85 {strides = array<i32>} : memref<32x1xf32, #tpu.memory_space<vmem>>, vector<32x1xf32>,
      %cst_63 = arith.constant 0.000000e+00 : f32
      %87 = vector.broadcast %cst_63 : f32 to vector<32x1xf32>
      %c0_64 = arith.constant 0 : index
      %c0_65 = arith.constant 0 : index
      %88 = vector.load %arg11[%c0_64, %c0_65] : memref<32x1xf32, #tpu.memory_space<vmem>>, vector<32x1xf32>
      tpu.vector_store %arg11[%c0_64, %c0_65], %87 {strides = array<i32>} : memref<32x1xf32, #tpu.memory_space<vmem>>, vector<32x1xf32>,
      %cst_66 = arith.constant 0.000000e+00 : f32
      %89 = vector.broadcast %cst_66 : f32 to vector<32x1xf32>
      %c0_67 = arith.constant 0 : index
      %c0_68 = arith.constant 0 : index
      %90 = vector.load %arg12[%c0_67, %c0_68] : memref<32x1xf32, #tpu.memory_space<vmem>>, vector<32x1xf32>
      tpu.vector_store %arg12[%c0_67, %c0_68], %89 {strides = array<i32>} : memref<32x1xf32, #tpu.memory_space<vmem>>, vector<32x1xf32>,
    } else {
    }
    %c0 = arith.constant 0 : index
    %c0_1 = arith.constant 0 : index
    %3 = vector.load %arg3[%c0, %c0_1] : memref<32x8xbf16, #tpu.memory_space<vmem>>, vector<32x8xbf16>
    %c0_2 = arith.constant 0 : index
    %c0_3 = arith.constant 0 : index
    %c0_4 = arith.constant 0 : index
    %4 = vector.load %arg2[%c0_2, %c0_3, %c0_4] : memref<1x8x8xbf16, #tpu.memory_space<vmem>>, vector<1x8x8xbf16>
    %5 = vector.shape_cast %4 : vector<1x8x8xbf16> to vector<8x8xbf16>
    %cst = arith.constant dense<0.000000e+00> : vector<32x8xf32>
    %6 = tpu.matmul %3, %5, %cst {dimension_numbers = #tpu.dot_dimension_numbers<[1], [0], [0], [1], [0, 0, 1, 1], [], []>} : vector<32x8xbf16>, vector<8x8xbf16>, vector<32x8xf32> -> vector<32x8xf32>
    %7 = arith.truncf %6 : vector<32x8xf32> to vector<32x8xbf16>
    %c0_5 = arith.constant 0 : index
    %c0_6 = arith.constant 0 : index
    %8 = vector.load %arg4[%c0_5, %c0_6] : memref<8x32xbf16, #tpu.memory_space<vmem>>, vector<8x32xbf16>
    %cst_7 = arith.constant dense<0.000000e+00> : vector<32x32xf32>
    %9 = tpu.matmul %7, %8, %cst_7 {dimension_numbers = #tpu.dot_dimension_numbers<[1], [0], [0], [1], [0, 0, 1, 1], [], []>} : vector<32x8xbf16>, vector<8x32xbf16>, vector<32x32xf32> -> vector<32x32xf32>
    %c0_8 = arith.constant 0 : index
    %c0_9 = arith.constant 0 : index
    %c0_10 = arith.constant 0 : index
    %10 = vector.load %arg5[%c0_8, %c0_9, %c0_10] : memref<1x32x32xbf16, #tpu.memory_space<vmem>>, vector<1x32x32xbf16>
    %11 = vector.shape_cast %10 : vector<1x32x32xbf16> to vector<32x32xbf16>
    %12 = arith.extf %11 : vector<32x32xbf16> to vector<32x32xf32>
    %13 = arith.negf %9 : vector<32x32xf32>
    %14 = math.exp %13 : vector<32x32xf32>
    %cst_11 = arith.constant 1.000000e+00 : f32
    %15 = vector.broadcast %cst_11 : f32 to vector<32x32xf32>
    %16 = arith.addf %15, %14 : vector<32x32xf32>
    %17 = arith.divf %15, %16 : vector<32x32xf32>
    %cst_12 = arith.constant 1.000000e+00 : f32
    %18 = vector.broadcast %cst_12 : f32 to vector<32x32xf32>
    %19 = arith.subf %18, %12 : vector<32x32xf32>
    %20 = arith.mulf %17, %12 : vector<32x32xf32>
    %c0_13 = arith.constant 0 : index
    %c0_14 = arith.constant 0 : index
    %21 = vector.load %arg7[%c0_13, %c0_14] : memref<32x1xf32, #tpu.memory_space<vmem>>, vector<32x1xf32>
    %cst_15 = arith.constant dense<0.000000e+00> : vector<32xf32>
    %22 = vector.multi_reduction <add>, %20, %cst_15 [1] : vector<32x32xf32> to vector<32xf32>
    %23 = vector.shape_cast %22 : vector<32xf32> to vector<32x1xf32>
    %24 = arith.addf %21, %23 : vector<32x1xf32>
    %c0_16 = arith.constant 0 : index
    %c0_17 = arith.constant 0 : index
    %25 = vector.load %arg7[%c0_16, %c0_17] : memref<32x1xf32, #tpu.memory_space<vmem>>, vector<32x1xf32>
    tpu.vector_store %arg7[%c0_16, %c0_17], %24 {strides = array<i32>} : memref<32x1xf32, #tpu.memory_space<vmem>>, vector<32x1xf32>,
    %c0_18 = arith.constant 0 : index
    %c0_19 = arith.constant 0 : index
    %26 = vector.load %arg8[%c0_18, %c0_19] : memref<32x1xf32, #tpu.memory_space<vmem>>, vector<32x1xf32>
    %cst_20 = arith.constant dense<0.000000e+00> : vector<32xf32>
    %27 = vector.multi_reduction <add>, %17, %cst_20 [1] : vector<32x32xf32> to vector<32xf32>
    %28 = vector.shape_cast %27 : vector<32xf32> to vector<32x1xf32>
    %29 = arith.addf %26, %28 : vector<32x1xf32>
    %c0_21 = arith.constant 0 : index
    %c0_22 = arith.constant 0 : index
    %30 = vector.load %arg8[%c0_21, %c0_22] : memref<32x1xf32, #tpu.memory_space<vmem>>, vector<32x1xf32>
    tpu.vector_store %arg8[%c0_21, %c0_22], %29 {strides = array<i32>} : memref<32x1xf32, #tpu.memory_space<vmem>>, vector<32x1xf32>,
    %c0_23 = arith.constant 0 : index
    %c0_24 = arith.constant 0 : index
    %31 = vector.load %arg9[%c0_23, %c0_24] : memref<32x1xf32, #tpu.memory_space<vmem>>, vector<32x1xf32>
    %cst_25 = arith.constant dense<0.000000e+00> : vector<32xf32>
    %32 = vector.multi_reduction <add>, %12, %cst_25 [1] : vector<32x32xf32> to vector<32xf32>
    %33 = vector.shape_cast %32 : vector<32xf32> to vector<32x1xf32>
    %34 = arith.addf %31, %33 : vector<32x1xf32>
    %c0_26 = arith.constant 0 : index
    %c0_27 = arith.constant 0 : index
    %35 = vector.load %arg9[%c0_26, %c0_27] : memref<32x1xf32, #tpu.memory_space<vmem>>, vector<32x1xf32>
    tpu.vector_store %arg9[%c0_26, %c0_27], %34 {strides = array<i32>} : memref<32x1xf32, #tpu.memory_space<vmem>>, vector<32x1xf32>,
    %36 = arith.mulf %17, %19 : vector<32x32xf32>
    %cst_28 = arith.constant 0.000000e+00 : f32
    %37 = vector.broadcast %cst_28 : f32 to vector<32x32xf32>
    %38 = arith.subf %37, %17 : vector<32x32xf32>
    %39 = math.exp %38 : vector<32x32xf32>
    %40 = math.log1p %39 : vector<32x32xf32>
    %41 = arith.addf %36, %40 : vector<32x32xf32>
    %cst_29 = arith.constant 1.000000e+00 : f32
    %42 = vector.broadcast %cst_29 : f32 to vector<32x32xf32>
    %43 = arith.subf %42, %17 : vector<32x32xf32>
    %44 = arith.mulf %43, %19 : vector<32x32xf32>
    %45 = arith.addf %20, %44 : vector<32x32xf32>
    %cst_30 = arith.constant 1.000000e+00 : f32
    %46 = vector.broadcast %cst_30 : f32 to vector<32x32xf32>
    %47 = arith.subf %46, %45 : vector<32x32xf32>
    %cst_31 = arith.constant 2.500000e-01 : f32
    %48 = vector.broadcast %cst_31 : f32 to vector<32x32xf32>
    %49 = arith.mulf %48, %12 : vector<32x32xf32>
    %cst_32 = arith.constant 7.500000e-01 : f32
    %50 = vector.broadcast %cst_32 : f32 to vector<32x32xf32>
    %51 = arith.mulf %50, %19 : vector<32x32xf32>
    %52 = arith.addf %49, %51 : vector<32x32xf32>
    %c0_33 = arith.constant 0 : index
    %c0_34 = arith.constant 0 : index
    %53 = vector.load %arg10[%c0_33, %c0_34] : memref<32x1xf32, #tpu.memory_space<vmem>>, vector<32x1xf32>
    %54 = arith.mulf %47, %47 : vector<32x32xf32>
    %55 = arith.mulf %41, %54 : vector<32x32xf32>
    %56 = arith.mulf %52, %55 : vector<32x32xf32>
    %cst_35 = arith.constant dense<0.000000e+00> : vector<32xf32>
    %57 = vector.multi_reduction <add>, %56, %cst_35 [1] : vector<32x32xf32> to vector<32xf32>
    %58 = vector.shape_cast %57 : vector<32xf32> to vector<32x1xf32>
    %59 = arith.addf %53, %58 : vector<32x1xf32>
    %c0_36 = arith.constant 0 : index
    %c0_37 = arith.constant 0 : index
    %60 = vector.load %arg10[%c0_36, %c0_37] : memref<32x1xf32, #tpu.memory_space<vmem>>, vector<32x1xf32>
    tpu.vector_store %arg10[%c0_36, %c0_37], %59 {strides = array<i32>} : memref<32x1xf32, #tpu.memory_space<vmem>>, vector<32x1xf32>,
    %cst_38 = arith.constant 5.000000e-01 : f32
    %61 = vector.broadcast %cst_38 : f32 to vector<32x32xf32>
    %62 = arith.cmpf oge, %17, %61 : vector<32x32xf32>
    %63 = arith.extui %62 : vector<32x32xi1> to vector<32x32xi32>
    %64 = arith.sitofp %63 : vector<32x32xi32> to vector<32x32xf32>
    %c0_39 = arith.constant 0 : index
    %c0_40 = arith.constant 0 : index
    %65 = vector.load %arg11[%c0_39, %c0_40] : memref<32x1xf32, #tpu.memory_space<vmem>>, vector<32x1xf32>
    %66 = arith.mulf %64, %12 : vector<32x32xf32>
    %cst_41 = arith.constant dense<0.000000e+00> : vector<32xf32>
    %67 = vector.multi_reduction <add>, %66, %cst_41 [1] : vector<32x32xf32> to vector<32xf32>
    %68 = vector.shape_cast %67 : vector<32xf32> to vector<32x1xf32>
    %69 = arith.addf %65, %68 : vector<32x1xf32>
    %c0_42 = arith.constant 0 : index
    %c0_43 = arith.constant 0 : index
    %70 = vector.load %arg11[%c0_42, %c0_43] : memref<32x1xf32, #tpu.memory_space<vmem>>, vector<32x1xf32>
    tpu.vector_store %arg11[%c0_42, %c0_43], %69 {strides = array<i32>} : memref<32x1xf32, #tpu.memory_space<vmem>>, vector<32x1xf32>,
    %c0_44 = arith.constant 0 : index
    %c0_45 = arith.constant 0 : index
    %71 = vector.load %arg12[%c0_44, %c0_45] : memref<32x1xf32, #tpu.memory_space<vmem>>, vector<32x1xf32>
    %cst_46 = arith.constant dense<0.000000e+00> : vector<32xf32>
    %72 = vector.multi_reduction <add>, %64, %cst_46 [1] : vector<32x32xf32> to vector<32xf32>
    %73 = vector.shape_cast %72 : vector<32xf32> to vector<32x1xf32>
    %74 = arith.addf %71, %73 : vector<32x1xf32>
    %c0_47 = arith.constant 0 : index
    %c0_48 = arith.constant 0 : index
    %75 = vector.load %arg12[%c0_47, %c0_48] : memref<32x1xf32, #tpu.memory_space<vmem>>, vector<32x1xf32>
    tpu.vector_store %arg12[%c0_47, %c0_48], %74 {strides = array<i32>} : memref<32x1xf32, #tpu.memory_space<vmem>>, vector<32x1xf32>,
    %c0_i32_49 = arith.constant 0 : i32
    %76 = arith.cmpi eq, %arg1, %c0_i32_49 : i32
    %77 = arith.extui %76 : i1 to i32
    %c0_i32_50 = arith.constant 0 : i32
    %78 = arith.cmpi ne, %77, %c0_i32_50 : i32
    scf.if %78 {
      %79 = tpu.iota {dimensions = array<i32: 0>} : vector<8x128xi32>
      %cst_51 = arith.constant 0.000000e+00 : f32
      %80 = vector.broadcast %cst_51 : f32 to vector<8x128xf32>
      %c0_i32_52 = arith.constant 0 : i32
      %81 = vector.broadcast %c0_i32_52 : i32 to vector<8x128xi32>
      %82 = arith.cmpi eq, %79, %81 : vector<8x128xi32>
      %c0_53 = arith.constant 0 : index
      %c0_54 = arith.constant 0 : index
      %83 = vector.load %arg7[%c0_53, %c0_54] : memref<32x1xf32, #tpu.memory_space<vmem>>, vector<32x1xf32>
      %84 = vector.shape_cast %83 : vector<32x1xf32> to vector<1x32x1xf32>
      %cst_55 = arith.constant dense<0.000000e+00> : vector<1xf32>
      %85 = vector.multi_reduction <add>, %84, %cst_55 [1, 2] : vector<1x32x1xf32> to vector<1xf32>
      %86 = vector.shape_cast %85 : vector<1xf32> to vector<1x1x1xf32>
      %87 = vector.extract %86[0, 0, 0] : f32 from vector<1x1x1xf32>
      %88 = vector.broadcast %87 : f32 to vector<8x128xf32>
      %89 = arith.select %82, %88, %80 : vector<8x128xi1>, vector<8x128xf32>
      %c1_i32 = arith.constant 1 : i32
      %90 = vector.broadcast %c1_i32 : i32 to vector<8x128xi32>
      %91 = arith.cmpi eq, %79, %90 : vector<8x128xi32>
      %c0_56 = arith.constant 0 : index
      %c0_57 = arith.constant 0 : index
      %92 = vector.load %arg8[%c0_56, %c0_57] : memref<32x1xf32, #tpu.memory_space<vmem>>, vector<32x1xf32>
      %93 = vector.shape_cast %92 : vector<32x1xf32> to vector<1x32x1xf32>
      %cst_58 = arith.constant dense<0.000000e+00> : vector<1xf32>
      %94 = vector.multi_reduction <add>, %93, %cst_58 [1, 2] : vector<1x32x1xf32> to vector<1xf32>
      %95 = vector.shape_cast %94 : vector<1xf32> to vector<1x1x1xf32>
      %96 = vector.extract %95[0, 0, 0] : f32 from vector<1x1x1xf32>
      %97 = vector.broadcast %96 : f32 to vector<8x128xf32>
      %98 = arith.select %91, %97, %89 : vector<8x128xi1>, vector<8x128xf32>
      %c2_i32 = arith.constant 2 : i32
      %99 = vector.broadcast %c2_i32 : i32 to vector<8x128xi32>
      %100 = arith.cmpi eq, %79, %99 : vector<8x128xi32>
      %c0_59 = arith.constant 0 : index
      %c0_60 = arith.constant 0 : index
      %101 = vector.load %arg9[%c0_59, %c0_60] : memref<32x1xf32, #tpu.memory_space<vmem>>, vector<32x1xf32>
      %102 = vector.shape_cast %101 : vector<32x1xf32> to vector<1x32x1xf32>
      %cst_61 = arith.constant dense<0.000000e+00> : vector<1xf32>
      %103 = vector.multi_reduction <add>, %102, %cst_61 [1, 2] : vector<1x32x1xf32> to vector<1xf32>
      %104 = vector.shape_cast %103 : vector<1xf32> to vector<1x1x1xf32>
      %105 = vector.extract %104[0, 0, 0] : f32 from vector<1x1x1xf32>
      %106 = vector.broadcast %105 : f32 to vector<8x128xf32>
      %107 = arith.select %100, %106, %98 : vector<8x128xi1>, vector<8x128xf32>
      %c3_i32 = arith.constant 3 : i32
      %108 = vector.broadcast %c3_i32 : i32 to vector<8x128xi32>
      %109 = arith.cmpi eq, %79, %108 : vector<8x128xi32>
      %c0_62 = arith.constant 0 : index
      %c0_63 = arith.constant 0 : index
      %110 = vector.load %arg10[%c0_62, %c0_63] : memref<32x1xf32, #tpu.memory_space<vmem>>, vector<32x1xf32>
      %111 = vector.shape_cast %110 : vector<32x1xf32> to vector<1x32x1xf32>
      %cst_64 = arith.constant dense<0.000000e+00> : vector<1xf32>
      %112 = vector.multi_reduction <add>, %111, %cst_64 [1, 2] : vector<1x32x1xf32> to vector<1xf32>
      %113 = vector.shape_cast %112 : vector<1xf32> to vector<1x1x1xf32>
      %114 = vector.extract %113[0, 0, 0] : f32 from vector<1x1x1xf32>
      %115 = vector.broadcast %114 : f32 to vector<8x128xf32>
      %116 = arith.select %109, %115, %107 : vector<8x128xi1>, vector<8x128xf32>
      %c4_i32 = arith.constant 4 : i32
      %117 = vector.broadcast %c4_i32 : i32 to vector<8x128xi32>
      %118 = arith.cmpi eq, %79, %117 : vector<8x128xi32>
      %c0_65 = arith.constant 0 : index
      %c0_66 = arith.constant 0 : index
      %119 = vector.load %arg11[%c0_65, %c0_66] : memref<32x1xf32, #tpu.memory_space<vmem>>, vector<32x1xf32>
      %120 = vector.shape_cast %119 : vector<32x1xf32> to vector<1x32x1xf32>
      %cst_67 = arith.constant dense<0.000000e+00> : vector<1xf32>
      %121 = vector.multi_reduction <add>, %120, %cst_67 [1, 2] : vector<1x32x1xf32> to vector<1xf32>
      %122 = vector.shape_cast %121 : vector<1xf32> to vector<1x1x1xf32>
      %123 = vector.extract %122[0, 0, 0] : f32 from vector<1x1x1xf32>
      %124 = vector.broadcast %123 : f32 to vector<8x128xf32>
      %125 = arith.select %118, %124, %116 : vector<8x128xi1>, vector<8x128xf32>
      %c5_i32 = arith.constant 5 : i32
      %126 = vector.broadcast %c5_i32 : i32 to vector<8x128xi32>
      %127 = arith.cmpi eq, %79, %126 : vector<8x128xi32>
      %c0_68 = arith.constant 0 : index
      %c0_69 = arith.constant 0 : index
      %128 = vector.load %arg12[%c0_68, %c0_69] : memref<32x1xf32, #tpu.memory_space<vmem>>, vector<32x1xf32>
      %129 = vector.shape_cast %128 : vector<32x1xf32> to vector<1x32x1xf32>
      %cst_70 = arith.constant dense<0.000000e+00> : vector<1xf32>
      %130 = vector.multi_reduction <add>, %129, %cst_70 [1, 2] : vector<1x32x1xf32> to vector<1xf32>
      %131 = vector.shape_cast %130 : vector<1xf32> to vector<1x1x1xf32>
      %132 = vector.extract %131[0, 0, 0] : f32 from vector<1x1x1xf32>
      %133 = vector.broadcast %132 : f32 to vector<8x128xf32>
      %134 = arith.select %127, %133, %125 : vector<8x128xi1>, vector<8x128xf32>
      %c0_71 = arith.constant 0 : index
      %c0_72 = arith.constant 0 : index
      %c0_73 = arith.constant 0 : index
      %135 = vector.load %arg6[%c0_71, %c0_72, %c0_73] : memref<1x8x128xf32, #tpu.memory_space<vmem>>, vector<1x8x128xf32>
      %136 = vector.shape_cast %135 : vector<1x8x128xf32> to vector<8x128xf32>
      %137 = vector.shape_cast %134 : vector<8x128xf32> to vector<1x8x128xf32>
      tpu.vector_store %arg6[%c0_71, %c0_72, %c0_73], %137 {strides = array<i32>} : memref<1x8x128xf32, #tpu.memory_space<vmem>>, vector<1x8x128xf32>,
    } else {
    }
    return
  }
  func.func @transform_0(%arg0: i32, %arg1: i32) -> (i32, i32, i32) {
    %c0_i32 = arith.constant 0 : i32
    %c0_i32_0 = arith.constant 0 : i32
    %c0_i32_1 = arith.constant 0 : i32
    return %arg0, %c0_i32, %c0_i32_0 : i32, i32, i32
  }
  func.func @transform_1(%arg0: i32, %arg1: i32) -> (i32, i32) {
    %c0_i32 = arith.constant 0 : i32
    %c0_i32_0 = arith.constant 0 : i32
    return %arg1, %c0_i32 : i32, i32
  }
  func.func @transform_2(%arg0: i32, %arg1: i32) -> (i32, i32) {
    %c0_i32 = arith.constant 0 : i32
    %c0_i32_0 = arith.constant 0 : i32
    %c0_i32_1 = arith.constant 0 : i32
    return %c0_i32, %c0_i32_0 : i32, i32
  }
  func.func @transform_3(%arg0: i32, %arg1: i32) -> (i32, i32, i32) {
    %c0_i32 = arith.constant 0 : i32
    %c0_i32_0 = arith.constant 0 : i32
    return %arg0, %arg1, %c0_i32 : i32, i32, i32
  }
  func.func @transform_4(%arg0: i32, %arg1: i32) -> (i32, i32, i32) {
    %c0_i32 = arith.constant 0 : i32
    %c0_i32_0 = arith.constant 0 : i32
    %c0_i32_1 = arith.constant 0 : i32
    return %arg0, %c0_i32, %c0_i32_0 : i32, i32, i32
  }
}

</mosaic_0001>

<llo_original>
// kernel: tpu_custom_call.1
$region0: #{tpu_custom_call.1}
  #allocation0 [shape = 'u32[]', space=smem, size = 0x4, offset = 0x4, fixed_abs, tag = 'smem constant byte address 0x4 - core index']
  #allocation1 [shape = 'u32[144,128]{1,0:T(1,128)}', space=vmem, size = 0x12000, scoped, tag = 'internal scratch']
  #allocation2 [shape = 'f32[32,1]{1,0:T(8,128)}', space=vmem, size = 0x4000, scoped, tag = 'scratch operand']
  #allocation3 [shape = 'f32[32,1]{1,0:T(8,128)}', space=vmem, size = 0x4000, scoped, tag = 'scratch operand']
  #allocation4 [shape = 'f32[32,1]{1,0:T(8,128)}', space=vmem, size = 0x4000, scoped, tag = 'scratch operand']
  #allocation5 [shape = 'f32[32,1]{1,0:T(8,128)}', space=vmem, size = 0x4000, scoped, tag = 'scratch operand']
  #allocation6 [shape = 'f32[32,1]{1,0:T(8,128)}', space=vmem, size = 0x4000, scoped, tag = 'scratch operand']
  #allocation7 [shape = 'f32[32,1]{1,0:T(8,128)}', space=vmem, size = 0x4000, scoped, tag = 'scratch operand']
  %s0 = inlined_call_operand.vmem [shape: bf16[4,8,8], index: 0, kind: input, shape index: {}]
  %s1 = inlined_call_operand.vmem [shape: bf16[32,8], index: 1, kind: input, shape index: {}]
  %s2 = inlined_call_operand.vmem [shape: bf16[8,32], index: 2, kind: input, shape index: {}]
  %s3 = inlined_call_operand.hbm [shape: bf16[4,32,32], index: 3, kind: input, shape index: {}]
  %s4 = inlined_call_operand.hbm [shape: f32[4,8,128], index: 4, kind: output, shape index: {}]
  %s5 = sld [smem:[#allocation0]]
  $region61: #{tpu_custom_call.1} parent=0
    _
  %s7 = ssub.s32 1, %s5
  %s8 = scalar_select 0, %s7, %s5
  $region1: #{tpu_custom_call.1} parent=0
    #allocation8 [shape = 'u8[16384]{0}', space=vmem, size = 0x4000, scoped, tag = 'input window, operand 3']
    #allocation9 [shape = 's32[2]{0}', space=sflag, size = 0x8, scoped, tag = 'scoped memory for tpu_custom_call.1']
    #allocation10 [shape = 's32[2]{0}', space=sflag, size = 0x8, scoped, tag = 'scoped memory for tpu_custom_call.1']
    #allocation11 [shape = 'u8[8192]{0}', space=vmem, size = 0x2000, scoped, tag = 'output window, operand 0']
    %9 = vsyncpa [#allocation9], 0
    %s10 = scalar_lea.sflag [#allocation9], 1
    %11 = vsyncpa %s10, 0
    %12 = vsyncpa [#allocation10], 0
    %s13 = scalar_lea.sflag [#allocation10], 1
    %14 = vsyncpa %s13, 0
    loop: start=0, step=1, limit=6
    $region2: #{tpu_custom_call.1} parent=1 // loop_pre_header
      _
    $region3: #{tpu_custom_call.1} parent=1 // loop_header
      %s16 = sphi 0, %s20
      %p17 = scmp.ge.s32.totalorder %s16, 6
      %s23 = sphi 0, %s35
      %s24 = sphi 0, %s31
      %s25 = sphi 0, %s23
      %s26 = sphi 0, %s24
      %s27 = sphi 0, %s25
      %s28 = sphi 0, %s26
      %s38 = sphi 0, %s40
      %s41 = sphi 0, %s38
      %s42 = sphi 0, %s41
      %s58 = sphi 0, %s42
      %s64 = sphi 0, %s66
      %s67 = sphi 0, %s64
      %s68 = sphi 0, %s67
      %s84 = sphi 0, %s68
      %s88 = sphi 0, %s88
      %s90 = sphi 0, %s88
      %s91 = sphi 0, %s90
      %s105 = sphi 0, %s91
      %s113 = sphi 0, %s115
      %s116 = sphi 0, %s113
      %s117 = sphi 0, %s116
      %s133 = sphi 0, %s117
      %s139 = sphi 0, %s141
      %s142 = sphi 0, %s139
      %s143 = sphi 0, %s142
      %s159 = sphi 0, %s143
    $region4: #{tpu_custom_call.1} parent=1 // loop_header_branch
      %19 = sbr.rel (%p17) target = $region8
    $region5: #{tpu_custom_call.1} parent=1 // loop_body
      %s21 = ssub.s32 %s16, 1
      %s22 = ssub.s32 %s16, 2
      %s29 = sadd.s32 1, %s24
      %p30 = scmp.ge.s32.totalorder %s29, 1
      %s31 = scalar_select %p30, 0, %s29
      %s32 = sadd.s32 1, %s23
      %s33 = scalar_select %p30, %s32, %s23
      %p34 = scmp.ge.s32.totalorder %s33, 4
      %s35 = scalar_select %p34, 0, %s33
      %s36 = ssub.s32 %s23, %s35
      %p37 = scmp.eq.s32.totalorder %s36, 0
      %s39 = sadd.s32 %s38, 1
      %s40 = scalar_select %p37, %s38, %s39
      %p43 = pneg %p37
      %p44 = scmp.eq.s32.totalorder %s16, 3
      %p45 = por %p43, %p44
      %p46 = scmp.ne.s32.totalorder %s38, %s41
      %p47 = scmp.eq.s32.totalorder %s16, 0
      %p48 = por %p46, %p47
      %p49 = scmp.ne.s32.totalorder %s38, %s41
      %p50 = scmp.eq.s32.totalorder %s21, 3
      %p51 = por %p49, %p50
      %p52 = scmp.ne.s32.totalorder %s41, %s42
      %p53 = scmp.eq.s32.totalorder %s21, 0
      %p54 = por %p52, %p53
      %p55 = scmp.ne.s32.totalorder %s41, %s42
      %p56 = scmp.eq.s32.totalorder %s22, 3
      %p57 = por %p55, %p56
      %p59 = scmp.ne.s32.totalorder %s42, %s58
      %p60 = scmp.eq.s32.totalorder %s22, 0
      %p61 = por %p59, %p60
      %s62 = ssub.s32 %s24, %s31
      %p63 = scmp.eq.s32.totalorder %s62, 0
      %s65 = sadd.s32 %s64, 1
      %s66 = scalar_select %p63, %s64, %s65
      %p69 = pneg %p63
      %p70 = scmp.eq.s32.totalorder %s16, 3
      %p71 = por %p69, %p70
      %p72 = scmp.ne.s32.totalorder %s64, %s67
      %p73 = scmp.eq.s32.totalorder %s16, 0
      %p74 = por %p72, %p73
      %p75 = scmp.ne.s32.totalorder %s64, %s67
      %p76 = scmp.eq.s32.totalorder %s21, 3
      %p77 = por %p75, %p76
      %p78 = scmp.ne.s32.totalorder %s67, %s68
      %p79 = scmp.eq.s32.totalorder %s21, 0
      %p80 = por %p78, %p79
      %p81 = scmp.ne.s32.totalorder %s67, %s68
      %p82 = scmp.eq.s32.totalorder %s22, 3
      %p83 = por %p81, %p82
      %p85 = scmp.ne.s32.totalorder %s68, %s84
      %p86 = scmp.eq.s32.totalorder %s22, 0
      %p87 = por %p85, %p86
      %s89 = sadd.s32 %s88, 1
      %p92 = scmp.eq.s32.totalorder %s16, 3
      %p93 = scmp.ne.s32.totalorder %s88, %s90
      %p94 = scmp.eq.s32.totalorder %s16, 0
      %p95 = por %p93, %p94
      %p96 = scmp.ne.s32.totalorder %s88, %s90
      %p97 = scmp.eq.s32.totalorder %s21, 3
      %p98 = por %p96, %p97
      %p99 = scmp.ne.s32.totalorder %s90, %s91
      %p100 = scmp.eq.s32.totalorder %s21, 0
      %p101 = por %p99, %p100
      %p102 = scmp.ne.s32.totalorder %s90, %s91
      %p103 = scmp.eq.s32.totalorder %s22, 3
      %p104 = por %p102, %p103
      %p106 = scmp.ne.s32.totalorder %s91, %s105
      %p107 = scmp.eq.s32.totalorder %s22, 0
      %p108 = por %p106, %p107
      %s109 = ssub.s32 %s23, %s35
      %s110 = ssub.s32 %s24, %s31
      %s111 = sor.u32 %s109, %s110
      %p112 = scmp.eq.s32.totalorder %s111, 0
      %s114 = sadd.s32 %s113, 1
      %s115 = scalar_select %p112, %s113, %s114
      %p118 = pneg %p112
      %p119 = scmp.eq.s32.totalorder %s16, 3
      %p120 = por %p118, %p119
      %p121 = scmp.ne.s32.totalorder %s113, %s116
      %p122 = scmp.eq.s32.totalorder %s16, 0
      %p123 = por %p121, %p122
      %p124 = scmp.ne.s32.totalorder %s113, %s116
      %p125 = scmp.eq.s32.totalorder %s21, 3
      %p126 = por %p124, %p125
      %p127 = scmp.ne.s32.totalorder %s116, %s117
      %p128 = scmp.eq.s32.totalorder %s21, 0
      %p129 = por %p127, %p128
      %p130 = scmp.ne.s32.totalorder %s116, %s117
      %p131 = scmp.eq.s32.totalorder %s22, 3
      %p132 = por %p130, %p131
      %p134 = scmp.ne.s32.totalorder %s117, %s133
      %p135 = scmp.eq.s32.totalorder %s22, 0
      %p136 = por %p134, %p135
      %s137 = ssub.s32 %s23, %s35
      %p138 = scmp.eq.s32.totalorder %s137, 0
      %s140 = sadd.s32 %s139, 1
      %s141 = scalar_select %p138, %s139, %s140
      %p144 = pneg %p138
      %p145 = scmp.eq.s32.totalorder %s16, 3
      %p146 = por %p144, %p145
      %p147 = scmp.ne.s32.totalorder %s139, %s142
      %p148 = scmp.eq.s32.totalorder %s16, 0
      %p149 = por %p147, %p148
      %p150 = scmp.ne.s32.totalorder %s139, %s142
      %p151 = scmp.eq.s32.totalorder %s21, 3
      %p152 = por %p150, %p151
      %p153 = scmp.ne.s32.totalorder %s142, %s143
      %p154 = scmp.eq.s32.totalorder %s21, 0
      %p155 = por %p153, %p154
      %p156 = scmp.ne.s32.totalorder %s142, %s143
      %p157 = scmp.eq.s32.totalorder %s22, 3
      %p158 = por %p156, %p157
      %p160 = scmp.ne.s32.totalorder %s143, %s159
      %p161 = scmp.eq.s32.totalorder %s22, 0
      %p162 = por %p160, %p161
      %p163 = scmp.le.s32.totalorder 1, %s16
      %p164 = scmp.lt.s32.totalorder %s16, 5
      %p165 = pnand %p163, %p164
      %p166 = pneg %p165
      // Predicated region
      $region9: #{tpu_custom_call.1} parent=5 // pred_check
        _
      $region10: #{tpu_custom_call.1} parent=5 // pred_check_branch
        %168 = sbr.rel (%p165) target = $region12
      $region11: #{tpu_custom_call.1} parent=5 // pred_region
        %s169 = ssub.s32 %s16, 1
        // Predicated region
        $region13: #{tpu_custom_call.1} parent=11 // pred_check
          %p170 = pneg %p80
        $region14: #{tpu_custom_call.1} parent=11 // pred_check_branch
          %172 = sbr.rel (%p170) target = $region16
        $region15: #{tpu_custom_call.1} parent=11 // pred_region
          %s173 = smul.u32 4, %s26
          %p174 = scmp.lt.s32.totalorder %s173, 3
          %s175 = scalar_select %p174, %s173, 3
          %s176 = smul.addr %s175, 4
          %s177 = scalar_lea.vmem %s1, %s176
          %s178 = smul.u32 4, %s26
        $region16: #{tpu_custom_call.1} parent=11 // pred_fallthru
          _
        // Predicated region
        $region17: #{tpu_custom_call.1} parent=11 // pred_check
          %p179 = pneg %p101
        $region18: #{tpu_custom_call.1} parent=11 // pred_check_branch
          %181 = sbr.rel (%p179) target = $region20
        $region19: #{tpu_custom_call.1} parent=11 // pred_region
          _
        $region20: #{tpu_custom_call.1} parent=11 // pred_fallthru
          _
      $region12: #{tpu_custom_call.1} parent=5 // pred_fallthru
        _
      %p182 = scmp.lt.s32.totalorder %s16, 4
      // Predicated region
      $region21: #{tpu_custom_call.1} parent=5 // pred_check
        %p183 = pneg %p182
      $region22: #{tpu_custom_call.1} parent=5 // pred_check_branch
        %185 = sbr.rel (%p183) target = $region24
      $region23: #{tpu_custom_call.1} parent=5 // pred_region
        // Predicated region
        $region25: #{tpu_custom_call.1} parent=23 // pred_check
          %p186 = pneg %p48
        $region26: #{tpu_custom_call.1} parent=23 // pred_check_branch
          %188 = sbr.rel (%p186) target = $region28
        $region27: #{tpu_custom_call.1} parent=23 // pred_region
          %p189 = scmp.lt.s32.totalorder %s23, 3
          %s190 = scalar_select %p189, %s23, 3
          %s191 = smul.addr %s190, 4
          %s192 = scalar_lea.vmem %s0, %s191
        $region28: #{tpu_custom_call.1} parent=23 // pred_fallthru
          _
        // Predicated region
        $region29: #{tpu_custom_call.1} parent=23 // pred_check
          %p193 = pneg %p123
        $region30: #{tpu_custom_call.1} parent=23 // pred_check_branch
          %195 = sbr.rel (%p193) target = $region32
        $region31: #{tpu_custom_call.1} parent=23 // pred_region
          %s196 = sand.u32 %s113, 1
          %s197 = scalar_lea.sflag [#allocation9], %s196
          %s198 = sand.u32 %s113, 1
          %s199 = smul.addr %s198, 16
          %s200 = scalar_lea.vmem [#allocation8], %s199
          %s201 = smul.u32 4, %s24
          %s203 = ssub.s32 256, 256
          %204 = vsyncadd %s197, %s203
          %s205 = smul.addr %s23, 4
          %s206 = sadd.s32 %s201, %s205
          %s207 = smul.addr %s206, 64
          %s208 = scalar_lea.hbm %s3, %s207
          %s209 = sshll.u32 %s200, 4
          %s210 = int_to_ptr.vmem [resolvable:$true] %s209
          %215 = dma.hbm_to_vmem [thread:$0]  %s208, 256, %s210, %s197, 64, 64, 4
        $region32: #{tpu_custom_call.1} parent=23 // pred_fallthru
          _
      $region24: #{tpu_custom_call.1} parent=5 // pred_fallthru
        _
      %p216 = scmp.le.s32.totalorder 1, %s16
      %p217 = scmp.lt.s32.totalorder %s16, 5
      %p218 = pnand %p216, %p217
      %p219 = pneg %p218
      // Predicated region
      $region33: #{tpu_custom_call.1} parent=5 // pred_check
        _
      $region34: #{tpu_custom_call.1} parent=5 // pred_check_branch
        %221 = sbr.rel (%p218) target = $region36
      $region35: #{tpu_custom_call.1} parent=5 // pred_region
        %s222 = ssub.s32 %s16, 1
        %s223 = sand.u32 %s116, 1
        %s224 = scalar_lea.sflag [#allocation9], %s223
        %s225 = sand.u32 %s116, 1
        %s226 = smul.addr %s225, 16
        %s227 = scalar_lea.vmem [#allocation8], %s226
        // Predicated region
        $region37: #{tpu_custom_call.1} parent=35 // pred_check
          %p228 = pneg %p129
        $region38: #{tpu_custom_call.1} parent=35 // pred_check_branch
          %230 = sbr.rel (%p228) target = $region40
        $region39: #{tpu_custom_call.1} parent=35 // pred_region
          %231 = dma.done %s224, 256
        $region40: #{tpu_custom_call.1} parent=35 // pred_fallthru
          _
        %p232 = scmp.lt.s32.totalorder %s25, 3
        %s233 = scalar_select %p232, %s25, 3
        %s234 = smul.addr %s233, 4
        %s235 = scalar_lea.vmem %s0, %s234
        %p236 = pneg %p54
        %p237 = pneg %p51
        %s238 = smul.u32 4, %s26
        %p239 = scmp.lt.s32.totalorder %s238, 3
        %s240 = scalar_select %p239, %s238, 3
        %s241 = smul.addr %s240, 4
        %s242 = scalar_lea.vmem %s1, %s241
        %p243 = pneg %p80
        %p244 = pneg %p77
        %p245 = pneg %p101
        %p246 = pneg %p98
        %s247 = sand.u32 %s116, 1
        %s248 = scalar_lea.sflag [#allocation9], %s247
        %s249 = sand.u32 %s116, 1
        %s250 = smul.addr %s249, 16
        %s251 = scalar_lea.vmem [#allocation8], %s250
        %p252 = pneg %p129
        %p253 = pneg %p126
        %p254 = pneg %p155
        %p255 = pneg %p152
        %s256 = sand.u32 %s142, 1
        %s257 = scalar_lea.sflag [#allocation10], %s256
        %s258 = sand.u32 %s142, 1
        %s259 = smul.addr %s258, 8
        %s260 = scalar_lea.vmem [#allocation11], %s259
        %p261 = scmp.lt.s32.totalorder %s25, 3
        %s262 = scalar_select %p261, %s25, 3
        %s263 = smul.addr %s262, 4
        %s264 = scalar_lea.vmem %s0, %s263
        %s265 = smul.u32 4, %s26
        %p266 = scmp.lt.s32.totalorder %s265, 3
        %s267 = scalar_select %p266, %s265, 3
        %s268 = smul.addr %s267, 4
        %s269 = scalar_lea.vmem %s1, %s268
        %s270 = smul.u32 4, %s26
        %s271 = smul.u32 4, %s26
        %p273 = scmp.eq.s32.totalorder %s26, 0
        // Predicated region
        $region41: #{tpu_custom_call.1} parent=35 // pred_check
          %p274 = pneg %p273
        $region42: #{tpu_custom_call.1} parent=35 // pred_check_branch
          %276 = sbr.rel (%p274) target = $region44
        $region43: #{tpu_custom_call.1} parent=35 // pred_region
          %vm277 = vcmask 7168
          %278 = vst.msk [vmem:[#allocation2] sm:$0xff] %vm277, 0.0
          %279 = vst.msk [vmem:[#allocation2 + $0x8] sm:$0xff] %vm277, 0.0
          %280 = vst.msk [vmem:[#allocation2 + $0x10] sm:$0xff] %vm277, 0.0
          %281 = vst.msk [vmem:[#allocation2 + $0x18] sm:$0xff] %vm277, 0.0
          %282 = vst.msk [vmem:[#allocation3] sm:$0xff] %vm277, 0.0
          %283 = vst.msk [vmem:[#allocation3 + $0x8] sm:$0xff] %vm277, 0.0
          %284 = vst.msk [vmem:[#allocation3 + $0x10] sm:$0xff] %vm277, 0.0
          %285 = vst.msk [vmem:[#allocation3 + $0x18] sm:$0xff] %vm277, 0.0
          %286 = vst.msk [vmem:[#allocation4] sm:$0xff] %vm277, 0.0
          %287 = vst.msk [vmem:[#allocation4 + $0x8] sm:$0xff] %vm277, 0.0
          %288 = vst.msk [vmem:[#allocation4 + $0x10] sm:$0xff] %vm277, 0.0
          %289 = vst.msk [vmem:[#allocation4 + $0x18] sm:$0xff] %vm277, 0.0
          %290 = vst.msk [vmem:[#allocation5] sm:$0xff] %vm277, 0.0
          %291 = vst.msk [vmem:[#allocation5 + $0x8] sm:$0xff] %vm277, 0.0
          %292 = vst.msk [vmem:[#allocation5 + $0x10] sm:$0xff] %vm277, 0.0
          %293 = vst.msk [vmem:[#allocation5 + $0x18] sm:$0xff] %vm277, 0.0
          %294 = vst.msk [vmem:[#allocation6] sm:$0xff] %vm277, 0.0
          %295 = vst.msk [vmem:[#allocation6 + $0x8] sm:$0xff] %vm277, 0.0
          %296 = vst.msk [vmem:[#allocation6 + $0x10] sm:$0xff] %vm277, 0.0
          %297 = vst.msk [vmem:[#allocation6 + $0x18] sm:$0xff] %vm277, 0.0
          %298 = vst.msk [vmem:[#allocation7] sm:$0xff] %vm277, 0.0
          %299 = vst.msk [vmem:[#allocation7 + $0x8] sm:$0xff] %vm277, 0.0
          %300 = vst.msk [vmem:[#allocation7 + $0x10] sm:$0xff] %vm277, 0.0
          %301 = vst.msk [vmem:[#allocation7 + $0x18] sm:$0xff] %vm277, 0.0
        $region44: #{tpu_custom_call.1} parent=35 // pred_fallthru
          _
        %v302 = vld [vmem:[%s269] sm:$0xf]
        %v303 = vld [vmem:[%s269 + $0x4] sm:$0xf]
        %v304 = vld [vmem:[%s269 + $0x8] sm:$0xf]
        %v305 = vld [vmem:[%s269 + $0xc] sm:$0xf]
        %v306 = vld [vmem:[%s264] sm:$0xf]
        %v311 = vunpack.c.l.b16 %v302
        %v312 = vunpack.c.l.b16 %v303
        %v313 = vunpack.c.l.b16 %v304
        %v314 = vunpack.c.l.b16 %v305
        %v315 = vpack.c.b16 %v312, %v311
        %v316 = vpack.c.b16 %v314, %v313
        %vm317 = vcmask 64512
        %v319 = vsel %vm317, %v315, 0
        %v322 = vsel %vm317, %v316, 0
        %vm324 = vcmask 1043456
        %v326 = vsel %vm324, %v306, 0
        %328 = vmatprep.subr.bf16.mxu0 0
        %329 = vmatpush1.bf16.msra.mxu0 %v326
        %330 = vmatprep.subr.bf16.mxu0 0
        %331 = vmatpush1.bf16.msra.mxu0 0
        %332 = vmatprep.subr.bf16.mxu0 0
        %333 = vmatpush1.bf16.msra.mxu0 0
        %334 = vmatprep.subr.bf16.mxu0 0
        %335 = vmatpush1.bf16.msra.mxu0 0
        %336 = vmatprep.subr.bf16.mxu0 0
        %337 = vmatpush1.bf16.msra.mxu0 0
        %338 = vmatprep.subr.bf16.mxu0 0
        %339 = vmatpush1.bf16.msra.mxu0 0
        %340 = vmatprep.subr.bf16.mxu0 0
        %341 = vmatpush1.bf16.msra.mxu0 0
        %342 = vmatprep.subr.bf16.mxu0 0
        %343 = vmatpush1.bf16.msra.mxu0 0
        %344 = vmatprep.subr.bf16.mxu0 0
        %345 = vmatpush1.bf16.msra.mxu0 0
        %346 = vmatprep.subr.bf16.mxu0 0
        %347 = vmatpush1.bf16.msra.mxu0 0
        %348 = vmatprep.subr.bf16.mxu0 0
        %349 = vmatpush1.bf16.msra.mxu0 0
        %350 = vmatprep.subr.bf16.mxu0 0
        %351 = vmatpush1.bf16.msra.mxu0 0
        %352 = vmatprep.subr.bf16.mxu0 0
        %353 = vmatpush1.bf16.msra.mxu0 0
        %354 = vmatprep.subr.bf16.mxu0 0
        %355 = vmatpush1.bf16.msra.mxu0 0
        %356 = vmatprep.subr.bf16.mxu0 0
        %357 = vmatpush1.bf16.msra.mxu0 0
        %358 = vmatprep.subr.bf16.mxu0 0
        %359 = vmatpush1.bf16.msra.mxu0 0
        %360 = vmatprep.mubr.bf16.mxu0 0
        %361 = vmatmul.mubr.bf16.gmra.mrb[0].mxu0 %v319
        %v362 = vpop.f32.mrb[0].mxu0
        %v363 = vadd.f32 0.0, %v362
        %v364 = vpop.f32.mrb[0].mxu0
        %v365 = vpop.f32.mrb[0].mxu0
        %v366 = vadd.f32 0.0, %v365
        %v367 = vpop.f32.mrb[0].mxu0
        %368 = vmatprep.mubr.bf16.mxu0 0
        %369 = vmatmul.mubr.bf16.gmra.mrb[0].mxu0 %v322
        %v370 = vpop.f32.mrb[0].mxu0
        %v371 = vadd.f32 0.0, %v370
        %v372 = vpop.f32.mrb[0].mxu0
        %v373 = vpop.f32.mrb[0].mxu0
        %v374 = vadd.f32 0.0, %v373
        %v375 = vpop.f32.mrb[0].mxu0
        %376 = vdwg.mxu0
        %v377 = vpack.c.bf16 %v366, %v363
        %v378 = vpack.c.bf16 %v374, %v371
        %v379 = vld [vmem:[%s2] sm:$0xf]
        %v381 = vsel %vm317, %v377, 0
        %v384 = vsel %vm317, %v378, 0
        %v387 = vsel %vm324, %v379, 0
        %389 = vmatprep.subr.bf16.mxu0 0
        %390 = vmatpush1.bf16.msra.mxu0 %v387
        %391 = vmatprep.subr.bf16.mxu0 0
        %392 = vmatpush1.bf16.msra.mxu0 0
        %393 = vmatprep.subr.bf16.mxu0 0
        %394 = vmatpush1.bf16.msra.mxu0 0
        %395 = vmatprep.subr.bf16.mxu0 0
        %396 = vmatpush1.bf16.msra.mxu0 0
        %397 = vmatprep.subr.bf16.mxu0 0
        %398 = vmatpush1.bf16.msra.mxu0 0
        %399 = vmatprep.subr.bf16.mxu0 0
        %400 = vmatpush1.bf16.msra.mxu0 0
        %401 = vmatprep.subr.bf16.mxu0 0
        %402 = vmatpush1.bf16.msra.mxu0 0
        %403 = vmatprep.subr.bf16.mxu0 0
        %404 = vmatpush1.bf16.msra.mxu0 0
        %405 = vmatprep.subr.bf16.mxu0 0
        %406 = vmatpush1.bf16.msra.mxu0 0
        %407 = vmatprep.subr.bf16.mxu0 0
        %408 = vmatpush1.bf16.msra.mxu0 0
        %409 = vmatprep.subr.bf16.mxu0 0
        %410 = vmatpush1.bf16.msra.mxu0 0
        %411 = vmatprep.subr.bf16.mxu0 0
        %412 = vmatpush1.bf16.msra.mxu0 0
        %413 = vmatprep.subr.bf16.mxu0 0
        %414 = vmatpush1.bf16.msra.mxu0 0
        %415 = vmatprep.subr.bf16.mxu0 0
        %416 = vmatpush1.bf16.msra.mxu0 0
        %417 = vmatprep.subr.bf16.mxu0 0
        %418 = vmatpush1.bf16.msra.mxu0 0
        %419 = vmatprep.subr.bf16.mxu0 0
        %420 = vmatpush1.bf16.msra.mxu0 0
        %421 = vmatprep.mubr.bf16.mxu0 0
        %422 = vmatmul.mubr.bf16.gmra.mrb[0].mxu0 %v381
        %v423 = vpop.f32.mrb[0].mxu0
        %v424 = vadd.f32 0.0, %v423
        %v425 = vpop.f32.mrb[0].mxu0
        %v426 = vpop.f32.mrb[0].mxu0
        %v427 = vadd.f32 0.0, %v426
        %v428 = vpop.f32.mrb[0].mxu0
        %429 = vmatprep.mubr.bf16.mxu0 0
        %430 = vmatmul.mubr.bf16.gmra.mrb[0].mxu0 %v384
        %v431 = vpop.f32.mrb[0].mxu0
        %v432 = vadd.f32 0.0, %v431
        %v433 = vpop.f32.mrb[0].mxu0
        %v434 = vpop.f32.mrb[0].mxu0
        %v435 = vadd.f32 0.0, %v434
        %v436 = vpop.f32.mrb[0].mxu0
        %437 = vdwg.mxu0
        %v438 = vld [vmem:[%s227] sm:$0xf]
        %v439 = vld [vmem:[%s227 + $0x4] sm:$0xf]
        %v440 = vld [vmem:[%s227 + $0x8] sm:$0xf]
        %v441 = vld [vmem:[%s227 + $0xc] sm:$0xf]
        %v442 = vunpack.c.l.bf16 %v438
        %v443 = vunpack.c.l.bf16 %v439
        %v444 = vunpack.c.l.bf16 %v440
        %v445 = vunpack.c.l.bf16 %v441
        %v446 = vxor.u32 %v424, 2147483648
        %v447 = vxor.u32 %v427, 2147483648
        %v448 = vxor.u32 %v432, 2147483648
        %v449 = vxor.u32 %v435, 2147483648
        %v450 = vmul.f32 %v446, 1.442695
        %v451 = vpow.pop %v450
        %v452 = vmul.f32 %v447, 1.442695
        %v453 = vpow.pop %v452
        %v454 = vmul.f32 %v448, 1.442695
        %v455 = vpow.pop %v454
        %v456 = vmul.f32 %v449, 1.442695
        %v457 = vpow.pop %v456
        %v458 = vadd.f32 %v451, 1.0
        %v459 = vadd.f32 %v453, 1.0
        %v460 = vadd.f32 %v455, 1.0
        %v461 = vadd.f32 %v457, 1.0
        %v462 = vrcp.pop %v458
        %v463 = vmul.f32 1.0, %v462
        %v464 = vrcp.pop %v459
        %v465 = vmul.f32 1.0, %v464
        %v466 = vrcp.pop %v460
        %v467 = vmul.f32 1.0, %v466
        %v468 = vrcp.pop %v461
        %v469 = vmul.f32 1.0, %v468
        %v470 = vsub.f32 1.0, %v442
        %v471 = vsub.f32 1.0, %v443
        %v472 = vsub.f32 1.0, %v444
        %v473 = vsub.f32 1.0, %v445
        %v474 = vmul.f32 %v463, %v442
        %v475 = vmul.f32 %v465, %v443
        %v476 = vmul.f32 %v467, %v444
        %v477 = vmul.f32 %v469, %v445
        %v478 = vld [vmem:[#allocation2] sm:$0xff]
        %v479 = vld [vmem:[#allocation2 + $0x8] sm:$0xff]
        %v480 = vld [vmem:[#allocation2 + $0x10] sm:$0xff]
        %v481 = vld [vmem:[#allocation2 + $0x18] sm:$0xff]
        %vm482 = vcmask 261120
        %v483 = vsel %vm482, %v474, 0.0
        %484 = vadd.xlane.f32.xlu0 %v483
        %v485 = vpop.xlane.xlu0 %484
        %v486 = vsel %vm482, %v475, 0.0
        %487 = vadd.xlane.f32.xlu0 %v486
        %v488 = vpop.xlane.xlu0 %487
        %v489 = vsel %vm482, %v476, 0.0
        %490 = vadd.xlane.f32.xlu0 %v489
        %v491 = vpop.xlane.xlu0 %490
        %v492 = vsel %vm482, %v477, 0.0
        %493 = vadd.xlane.f32.xlu0 %v492
        %v494 = vpop.xlane.xlu0 %493
        %v495 = vadd.f32 %v478, %v485
        %v496 = vadd.f32 %v479, %v488
        %v497 = vadd.f32 %v480, %v491
        %v498 = vadd.f32 %v481, %v494
        %vm499 = vcmask 7168
        %500 = vst.msk [vmem:[#allocation2] sm:$0xff] %vm499, %v495
        %501 = vst.msk [vmem:[#allocation2 + $0x8] sm:$0xff] %vm499, %v496
        %502 = vst.msk [vmem:[#allocation2 + $0x10] sm:$0xff] %vm499, %v497
        %503 = vst.msk [vmem:[#allocation2 + $0x18] sm:$0xff] %vm499, %v498
        %v504 = vld [vmem:[#allocation3] sm:$0xff]
        %v505 = vld [vmem:[#allocation3 + $0x8] sm:$0xff]
        %v506 = vld [vmem:[#allocation3 + $0x10] sm:$0xff]
        %v507 = vld [vmem:[#allocation3 + $0x18] sm:$0xff]
        %v508 = vsel %vm482, %v463, 0.0
        %509 = vadd.xlane.f32.xlu0 %v508
        %v510 = vpop.xlane.xlu0 %509
        %v511 = vsel %vm482, %v465, 0.0
        %512 = vadd.xlane.f32.xlu0 %v511
        %v513 = vpop.xlane.xlu0 %512
        %v514 = vsel %vm482, %v467, 0.0
        %515 = vadd.xlane.f32.xlu0 %v514
        %v516 = vpop.xlane.xlu0 %515
        %v517 = vsel %vm482, %v469, 0.0
        %518 = vadd.xlane.f32.xlu0 %v517
        %v519 = vpop.xlane.xlu0 %518
        %v520 = vadd.f32 %v504, %v510
        %v521 = vadd.f32 %v505, %v513
        %v522 = vadd.f32 %v506, %v516
        %v523 = vadd.f32 %v507, %v519
        %524 = vst.msk [vmem:[#allocation3] sm:$0xff] %vm499, %v520
        %525 = vst.msk [vmem:[#allocation3 + $0x8] sm:$0xff] %vm499, %v521
        %526 = vst.msk [vmem:[#allocation3 + $0x10] sm:$0xff] %vm499, %v522
        %527 = vst.msk [vmem:[#allocation3 + $0x18] sm:$0xff] %vm499, %v523
        %v528 = vld [vmem:[#allocation4] sm:$0xff]
        %v529 = vld [vmem:[#allocation4 + $0x8] sm:$0xff]
        %v530 = vld [vmem:[#allocation4 + $0x10] sm:$0xff]
        %v531 = vld [vmem:[#allocation4 + $0x18] sm:$0xff]
        %v532 = vsel %vm482, %v442, 0.0
        %533 = vadd.xlane.f32.xlu0 %v532
        %v534 = vpop.xlane.xlu0 %533
        %v535 = vsel %vm482, %v443, 0.0
        %536 = vadd.xlane.f32.xlu0 %v535
        %v537 = vpop.xlane.xlu0 %536
        %v538 = vsel %vm482, %v444, 0.0
        %539 = vadd.xlane.f32.xlu0 %v538
        %v540 = vpop.xlane.xlu0 %539
        %v541 = vsel %vm482, %v445, 0.0
        %542 = vadd.xlane.f32.xlu0 %v541
        %v543 = vpop.xlane.xlu0 %542
        %v544 = vadd.f32 %v528, %v534
        %v545 = vadd.f32 %v529, %v537
        %v546 = vadd.f32 %v530, %v540
        %v547 = vadd.f32 %v531, %v543
        %548 = vst.msk [vmem:[#allocation4] sm:$0xff] %vm499, %v544
        %549 = vst.msk [vmem:[#allocation4 + $0x8] sm:$0xff] %vm499, %v545
        %550 = vst.msk [vmem:[#allocation4 + $0x10] sm:$0xff] %vm499, %v546
        %551 = vst.msk [vmem:[#allocation4 + $0x18] sm:$0xff] %vm499, %v547
        %v552 = vmul.f32 %v463, %v470
        %v553 = vmul.f32 %v465, %v471
        %v554 = vmul.f32 %v467, %v472
        %v555 = vmul.f32 %v469, %v473
        %v556 = vsub.f32 0.0, %v463
        %v557 = vsub.f32 0.0, %v465
        %v558 = vsub.f32 0.0, %v467
        %v559 = vsub.f32 0.0, %v469
        %v560 = vmul.f32 %v556, 1.442695
        %v561 = vpow.pop %v560
        %v562 = vmul.f32 %v557, 1.442695
        %v563 = vpow.pop %v562
        %v564 = vmul.f32 %v558, 1.442695
        %v565 = vpow.pop %v564
        %v566 = vmul.f32 %v559, 1.442695
        %v567 = vpow.pop %v566
        %v568 = vadd.f32 %v561, 1.0
        %v569 = vlog2.pop %v568
        %v570 = vmul.f32 %v569, 0.6931472
        %v571 = vmul.f32 -0.5, %v561
        %v572 = vadd.f32 %v571, 1.0
        %v573 = vmul.f32 %v572, %v561
        %v574 = vand.u32 2147483647, %v561
        %vm575 = vcmp.lt.f32.partialorder %v574, 0.0004427343
        %v576 = vsel %vm575, %v573, %v570
        %v577 = vadd.f32 %v563, 1.0
        %v578 = vlog2.pop %v577
        %v579 = vmul.f32 %v578, 0.6931472
        %v580 = vmul.f32 -0.5, %v563
        %v581 = vadd.f32 %v580, 1.0
        %v582 = vmul.f32 %v581, %v563
        %v583 = vand.u32 2147483647, %v563
        %vm584 = vcmp.lt.f32.partialorder %v583, 0.0004427343
        %v585 = vsel %vm584, %v582, %v579
        %v586 = vadd.f32 %v565, 1.0
        %v587 = vlog2.pop %v586
        %v588 = vmul.f32 %v587, 0.6931472
        %v589 = vmul.f32 -0.5, %v565
        %v590 = vadd.f32 %v589, 1.0
        %v591 = vmul.f32 %v590, %v565
        %v592 = vand.u32 2147483647, %v565
        %vm593 = vcmp.lt.f32.partialorder %v592, 0.0004427343
        %v594 = vsel %vm593, %v591, %v588
        %v595 = vadd.f32 %v567, 1.0
        %v596 = vlog2.pop %v595
        %v597 = vmul.f32 %v596, 0.6931472
        %v598 = vmul.f32 -0.5, %v567
        %v599 = vadd.f32 %v598, 1.0
        %v600 = vmul.f32 %v599, %v567
        %v601 = vand.u32 2147483647, %v567
        %vm602 = vcmp.lt.f32.partialorder %v601, 0.0004427343
        %v603 = vsel %vm602, %v600, %v597
        %v604 = vadd.f32 %v552, %v576
        %v605 = vadd.f32 %v553, %v585
        %v606 = vadd.f32 %v554, %v594
        %v607 = vadd.f32 %v555, %v603
        %v608 = vsub.f32 1.0, %v463
        %v609 = vsub.f32 1.0, %v465
        %v610 = vsub.f32 1.0, %v467
        %v611 = vsub.f32 1.0, %v469
        %v612 = vmul.f32 %v608, %v470
        %v613 = vmul.f32 %v609, %v471
        %v614 = vmul.f32 %v610, %v472
        %v615 = vmul.f32 %v611, %v473
        %v616 = vadd.f32 %v474, %v612
        %v617 = vadd.f32 %v475, %v613
        %v618 = vadd.f32 %v476, %v614
        %v619 = vadd.f32 %v477, %v615
        %v620 = vsub.f32 1.0, %v616
        %v621 = vsub.f32 1.0, %v617
        %v622 = vsub.f32 1.0, %v618
        %v623 = vsub.f32 1.0, %v619
        %v624 = vmul.f32 %v442, 0.25
        %v625 = vmul.f32 %v443, 0.25
        %v626 = vmul.f32 %v444, 0.25
        %v627 = vmul.f32 %v445, 0.25
        %v628 = vmul.f32 %v470, 0.75
        %v629 = vmul.f32 %v471, 0.75
        %v630 = vmul.f32 %v472, 0.75
        %v631 = vmul.f32 %v473, 0.75
        %v632 = vadd.f32 %v624, %v628
        %v633 = vadd.f32 %v625, %v629
        %v634 = vadd.f32 %v626, %v630
        %v635 = vadd.f32 %v627, %v631
        %v636 = vld [vmem:[#allocation5] sm:$0xff]
        %v637 = vld [vmem:[#allocation5 + $0x8] sm:$0xff]
        %v638 = vld [vmem:[#allocation5 + $0x10] sm:$0xff]
        %v639 = vld [vmem:[#allocation5 + $0x18] sm:$0xff]
        %v640 = vmul.f32 %v620, %v620
        %v641 = vmul.f32 %v621, %v621
        %v642 = vmul.f32 %v622, %v622
        %v643 = vmul.f32 %v623, %v623
        %v644 = vmul.f32 %v604, %v640
        %v645 = vmul.f32 %v605, %v641
        %v646 = vmul.f32 %v606, %v642
        %v647 = vmul.f32 %v607, %v643
        %v648 = vmul.f32 %v632, %v644
        %v649 = vmul.f32 %v633, %v645
        %v650 = vmul.f32 %v634, %v646
        %v651 = vmul.f32 %v635, %v647
        %v652 = vsel %vm482, %v648, 0.0
        %653 = vadd.xlane.f32.xlu0 %v652
        %v654 = vpop.xlane.xlu0 %653
        %v655 = vsel %vm482, %v649, 0.0
        %656 = vadd.xlane.f32.xlu0 %v655
        %v657 = vpop.xlane.xlu0 %656
        %v658 = vsel %vm482, %v650, 0.0
        %659 = vadd.xlane.f32.xlu0 %v658
        %v660 = vpop.xlane.xlu0 %659
        %v661 = vsel %vm482, %v651, 0.0
        %662 = vadd.xlane.f32.xlu0 %v661
        %v663 = vpop.xlane.xlu0 %662
        %v664 = vadd.f32 %v636, %v654
        %v665 = vadd.f32 %v637, %v657
        %v666 = vadd.f32 %v638, %v660
        %v667 = vadd.f32 %v639, %v663
        %668 = vst.msk [vmem:[#allocation5] sm:$0xff] %vm499, %v664
        %669 = vst.msk [vmem:[#allocation5 + $0x8] sm:$0xff] %vm499, %v665
        %670 = vst.msk [vmem:[#allocation5 + $0x10] sm:$0xff] %vm499, %v666
        %671 = vst.msk [vmem:[#allocation5 + $0x18] sm:$0xff] %vm499, %v667
        %vm672 = vcmp.ge.f32.partialorder %v463, 0.5
        %vm673 = vcmp.ge.f32.partialorder %v465, 0.5
        %vm674 = vcmp.ge.f32.partialorder %v467, 0.5
        %vm675 = vcmp.ge.f32.partialorder %v469, 0.5
        %v676 = vsel %vm672, 1, 0
        %v677 = vsel %vm673, 1, 0
        %v678 = vsel %vm674, 1, 0
        %v679 = vsel %vm675, 1, 0
        %v680 = vcvt.s32.f32 %v676
        %v681 = vcvt.s32.f32 %v677
        %v682 = vcvt.s32.f32 %v678
        %v683 = vcvt.s32.f32 %v679
        %v684 = vld [vmem:[#allocation6] sm:$0xff]
        %v685 = vld [vmem:[#allocation6 + $0x8] sm:$0xff]
        %v686 = vld [vmem:[#allocation6 + $0x10] sm:$0xff]
        %v687 = vld [vmem:[#allocation6 + $0x18] sm:$0xff]
        %v688 = vmul.f32 %v680, %v442
        %v689 = vmul.f32 %v681, %v443
        %v690 = vmul.f32 %v682, %v444
        %v691 = vmul.f32 %v683, %v445
        %v692 = vsel %vm482, %v688, 0.0
        %693 = vadd.xlane.f32.xlu0 %v692
        %v694 = vpop.xlane.xlu0 %693
        %v695 = vsel %vm482, %v689, 0.0
        %696 = vadd.xlane.f32.xlu0 %v695
        %v697 = vpop.xlane.xlu0 %696
        %v698 = vsel %vm482, %v690, 0.0
        %699 = vadd.xlane.f32.xlu0 %v698
        %v700 = vpop.xlane.xlu0 %699
        %v701 = vsel %vm482, %v691, 0.0
        %702 = vadd.xlane.f32.xlu0 %v701
        %v703 = vpop.xlane.xlu0 %702
        %v704 = vadd.f32 %v684, %v694
        %v705 = vadd.f32 %v685, %v697
        %v706 = vadd.f32 %v686, %v700
        %v707 = vadd.f32 %v687, %v703
        %708 = vst.msk [vmem:[#allocation6] sm:$0xff] %vm499, %v704
        %709 = vst.msk [vmem:[#allocation6 + $0x8] sm:$0xff] %vm499, %v705
        %710 = vst.msk [vmem:[#allocation6 + $0x10] sm:$0xff] %vm499, %v706
        %711 = vst.msk [vmem:[#allocation6 + $0x18] sm:$0xff] %vm499, %v707
        %v712 = vld [vmem:[#allocation7] sm:$0xff]
        %v713 = vld [vmem:[#allocation7 + $0x8] sm:$0xff]
        %v714 = vld [vmem:[#allocation7 + $0x10] sm:$0xff]
        %v715 = vld [vmem:[#allocation7 + $0x18] sm:$0xff]
        %v716 = vsel %vm482, %v680, 0.0
        %717 = vadd.xlane.f32.xlu0 %v716
        %v718 = vpop.xlane.xlu0 %717
        %v719 = vsel %vm482, %v681, 0.0
        %720 = vadd.xlane.f32.xlu0 %v719
        %v721 = vpop.xlane.xlu0 %720
        %v722 = vsel %vm482, %v682, 0.0
        %723 = vadd.xlane.f32.xlu0 %v722
        %v724 = vpop.xlane.xlu0 %723
        %v725 = vsel %vm482, %v683, 0.0
        %726 = vadd.xlane.f32.xlu0 %v725
        %v727 = vpop.xlane.xlu0 %726
        %v728 = vadd.f32 %v712, %v718
        %v729 = vadd.f32 %v713, %v721
        %v730 = vadd.f32 %v714, %v724
        %v731 = vadd.f32 %v715, %v727
        %732 = vst.msk [vmem:[#allocation7] sm:$0xff] %vm499, %v728
        %733 = vst.msk [vmem:[#allocation7 + $0x8] sm:$0xff] %vm499, %v729
        %734 = vst.msk [vmem:[#allocation7 + $0x10] sm:$0xff] %vm499, %v730
        %735 = vst.msk [vmem:[#allocation7 + $0x18] sm:$0xff] %vm499, %v731
        // Predicated region
        $region45: #{tpu_custom_call.1} parent=35 // pred_check
          %p736 = pneg %p273
        $region46: #{tpu_custom_call.1} parent=35 // pred_check_branch
          %738 = sbr.rel (%p736) target = $region48
        $region47: #{tpu_custom_call.1} parent=35 // pred_region
          %v739 = vlaneseq
          %v740 = vshrl.u32 %v739, 7
          %vm741 = vcmp.eq.s32.totalorder %v740, 0
          %v742 = vld [vmem:[#allocation2] sm:$0xff]
          %v743 = vld [vmem:[#allocation2 + $0x8] sm:$0xff]
          %v744 = vld [vmem:[#allocation2 + $0x10] sm:$0xff]
          %v745 = vld [vmem:[#allocation2 + $0x18] sm:$0xff]
          %v746 = vsel %vm499, %v742, 0.0
          %v747 = vsel %vm499, %v743, 0.0
          %v748 = vadd.f32 %v746, %v747
          %v749 = vsel %vm499, %v744, 0.0
          %v750 = vadd.f32 %v748, %v749
          %v751 = vsel %vm499, %v745, 0.0
          %v752 = vadd.f32 %v750, %v751
          %753 = vadd.xlane.f32.xlu0 %v752
          %v754 = vpop.xlane.xlu0 %753
          %v755 = vrot.slane %v754, 4
          %v756 = vadd.f32 %v754, %v755
          %v757 = vrot.slane %v756, 2
          %v758 = vadd.f32 %v756, %v757
          %v759 = vrot.slane %v758, 1
          %v760 = vadd.f32 %v758, %v759
          %s761 = vtos %v760
          %v762 = vstv %s761
          %v763 = vsel %vm741, %v762, 0.0
          %vm764 = vcmp.eq.s32.totalorder %v740, 1
          %v765 = vld [vmem:[#allocation3] sm:$0xff]
          %v766 = vld [vmem:[#allocation3 + $0x8] sm:$0xff]
          %v767 = vld [vmem:[#allocation3 + $0x10] sm:$0xff]
          %v768 = vld [vmem:[#allocation3 + $0x18] sm:$0xff]
          %v769 = vsel %vm499, %v765, 0.0
          %v770 = vsel %vm499, %v766, 0.0
          %v771 = vadd.f32 %v769, %v770
          %v772 = vsel %vm499, %v767, 0.0
          %v773 = vadd.f32 %v771, %v772
          %v774 = vsel %vm499, %v768, 0.0
          %v775 = vadd.f32 %v773, %v774
          %776 = vadd.xlane.f32.xlu0 %v775
          %v777 = vpop.xlane.xlu0 %776
          %v778 = vrot.slane %v777, 4
          %v779 = vadd.f32 %v777, %v778
          %v780 = vrot.slane %v779, 2
          %v781 = vadd.f32 %v779, %v780
          %v782 = vrot.slane %v781, 1
          %v783 = vadd.f32 %v781, %v782
          %s784 = vtos %v783
          %v785 = vstv %s784
          %v786 = vsel %vm764, %v785, %v763
          %vm787 = vcmp.eq.s32.totalorder %v740, 2
          %v788 = vld [vmem:[#allocation4] sm:$0xff]
          %v789 = vld [vmem:[#allocation4 + $0x8] sm:$0xff]
          %v790 = vld [vmem:[#allocation4 + $0x10] sm:$0xff]
          %v791 = vld [vmem:[#allocation4 + $0x18] sm:$0xff]
          %v792 = vsel %vm499, %v788, 0.0
          %v793 = vsel %vm499, %v789, 0.0
          %v794 = vadd.f32 %v792, %v793
          %v795 = vsel %vm499, %v790, 0.0
          %v796 = vadd.f32 %v794, %v795
          %v797 = vsel %vm499, %v791, 0.0
          %v798 = vadd.f32 %v796, %v797
          %799 = vadd.xlane.f32.xlu0 %v798
          %v800 = vpop.xlane.xlu0 %799
          %v801 = vrot.slane %v800, 4
          %v802 = vadd.f32 %v800, %v801
          %v803 = vrot.slane %v802, 2
          %v804 = vadd.f32 %v802, %v803
          %v805 = vrot.slane %v804, 1
          %v806 = vadd.f32 %v804, %v805
          %s807 = vtos %v806
          %v808 = vstv %s807
          %v809 = vsel %vm787, %v808, %v786
          %vm810 = vcmp.eq.s32.totalorder %v740, 3
          %v811 = vld [vmem:[#allocation5] sm:$0xff]
          %v812 = vld [vmem:[#allocation5 + $0x8] sm:$0xff]
          %v813 = vld [vmem:[#allocation5 + $0x10] sm:$0xff]
          %v814 = vld [vmem:[#allocation5 + $0x18] sm:$0xff]
          %v815 = vsel %vm499, %v811, 0.0
          %v816 = vsel %vm499, %v812, 0.0
          %v817 = vadd.f32 %v815, %v816
          %v818 = vsel %vm499, %v813, 0.0
          %v819 = vadd.f32 %v817, %v818
          %v820 = vsel %vm499, %v814, 0.0
          %v821 = vadd.f32 %v819, %v820
          %822 = vadd.xlane.f32.xlu0 %v821
          %v823 = vpop.xlane.xlu0 %822
          %v824 = vrot.slane %v823, 4
          %v825 = vadd.f32 %v823, %v824
          %v826 = vrot.slane %v825, 2
          %v827 = vadd.f32 %v825, %v826
          %v828 = vrot.slane %v827, 1
          %v829 = vadd.f32 %v827, %v828
          %s830 = vtos %v829
          %v831 = vstv %s830
          %v832 = vsel %vm810, %v831, %v809
          %vm833 = vcmp.eq.s32.totalorder %v740, 4
          %v834 = vld [vmem:[#allocation6] sm:$0xff]
          %v835 = vld [vmem:[#allocation6 + $0x8] sm:$0xff]
          %v836 = vld [vmem:[#allocation6 + $0x10] sm:$0xff]
          %v837 = vld [vmem:[#allocation6 + $0x18] sm:$0xff]
          %v838 = vsel %vm499, %v834, 0.0
          %v839 = vsel %vm499, %v835, 0.0
          %v840 = vadd.f32 %v838, %v839
          %v841 = vsel %vm499, %v836, 0.0
          %v842 = vadd.f32 %v840, %v841
          %v843 = vsel %vm499, %v837, 0.0
          %v844 = vadd.f32 %v842, %v843
          %845 = vadd.xlane.f32.xlu0 %v844
          %v846 = vpop.xlane.xlu0 %845
          %v847 = vrot.slane %v846, 4
          %v848 = vadd.f32 %v846, %v847
          %v849 = vrot.slane %v848, 2
          %v850 = vadd.f32 %v848, %v849
          %v851 = vrot.slane %v850, 1
          %v852 = vadd.f32 %v850, %v851
          %s853 = vtos %v852
          %v854 = vstv %s853
          %v855 = vsel %vm833, %v854, %v832
          %vm856 = vcmp.eq.s32.totalorder %v740, 5
          %v857 = vld [vmem:[#allocation7] sm:$0xff]
          %v858 = vld [vmem:[#allocation7 + $0x8] sm:$0xff]
          %v859 = vld [vmem:[#allocation7 + $0x10] sm:$0xff]
          %v860 = vld [vmem:[#allocation7 + $0x18] sm:$0xff]
          %v861 = vsel %vm499, %v857, 0.0
          %v862 = vsel %vm499, %v858, 0.0
          %v863 = vadd.f32 %v861, %v862
          %v864 = vsel %vm499, %v859, 0.0
          %v865 = vadd.f32 %v863, %v864
          %v866 = vsel %vm499, %v860, 0.0
          %v867 = vadd.f32 %v865, %v866
          %868 = vadd.xlane.f32.xlu0 %v867
          %v869 = vpop.xlane.xlu0 %868
          %v870 = vrot.slane %v869, 4
          %v871 = vadd.f32 %v869, %v870
          %v872 = vrot.slane %v871, 2
          %v873 = vadd.f32 %v871, %v872
          %v874 = vrot.slane %v873, 1
          %v875 = vadd.f32 %v873, %v874
          %s876 = vtos %v875
          %v877 = vstv %s876
          %v878 = vsel %vm856, %v877, %v855
          %879 = vst [vmem:[%s260] sm:$0xff] %v878
        $region48: #{tpu_custom_call.1} parent=35 // pred_fallthru
          _
        %s880 = sand.u32 %s142, 1
        %s881 = scalar_lea.sflag [#allocation10], %s880
        %s882 = sand.u32 %s142, 1
        %s883 = smul.addr %s882, 8
        %s884 = scalar_lea.vmem [#allocation11], %s883
        // Predicated region
        $region49: #{tpu_custom_call.1} parent=35 // pred_check
          %p885 = pneg %p152
        $region50: #{tpu_custom_call.1} parent=35 // pred_check_branch
          %887 = sbr.rel (%p885) target = $region52
        $region51: #{tpu_custom_call.1} parent=35 // pred_region
          %s889 = ssub.s32 128, 128
          %890 = vsyncadd %s881, %s889
          %s891 = smul.addr %s25, 128
          %s892 = scalar_lea.hbm %s4, %s891
          %s894 = sshll.u32 %s884, 4
          %s895 = int_to_ptr.vmem [resolvable:$true] %s894
          %897 = dma.vmem_to_hbm [thread:$0]  %s895, 128, %s892, %s881
        $region52: #{tpu_custom_call.1} parent=35 // pred_fallthru
          _
      $region36: #{tpu_custom_call.1} parent=5 // pred_fallthru
        _
      %p898 = scmp.le.s32.totalorder 2, %s16
      // Predicated region
      $region53: #{tpu_custom_call.1} parent=5 // pred_check
        %p899 = pneg %p898
      $region54: #{tpu_custom_call.1} parent=5 // pred_check_branch
        %901 = sbr.rel (%p899) target = $region56
      $region55: #{tpu_custom_call.1} parent=5 // pred_region
        %s902 = ssub.s32 %s16, 2
        // Predicated region
        $region57: #{tpu_custom_call.1} parent=55 // pred_check
          %p903 = pneg %p158
        $region58: #{tpu_custom_call.1} parent=55 // pred_check_branch
          %905 = sbr.rel (%p903) target = $region60
        $region59: #{tpu_custom_call.1} parent=55 // pred_region
          %s906 = sand.u32 %s143, 1
          %s907 = scalar_lea.sflag [#allocation10], %s906
          %s908 = sand.u32 %s143, 1
          %s909 = smul.addr %s908, 8
          %s910 = scalar_lea.vmem [#allocation11], %s909
          %911 = dma.done %s907, 128
        $region60: #{tpu_custom_call.1} parent=55 // pred_fallthru
          _
      $region56: #{tpu_custom_call.1} parent=5 // pred_fallthru
        _
    $region6: #{tpu_custom_call.1} parent=1 // loop_footer
      %s20 = sadd.s32 1, %s16
    $region7: #{tpu_custom_call.1} parent=1 // loop_footer_branch
      %15 = sbr.rel target = $region3
    $region8: #{tpu_custom_call.1} parent=1 // loop_exit
      _
    %912 = vsyncpa [#allocation9], 1
    %s913 = scalar_lea.sflag [#allocation9], 1
    %914 = vsyncpa %s913, 1
    %915 = vsyncpa [#allocation10], 1
    %s916 = scalar_lea.sflag [#allocation10], 1
    %917 = vsyncpa %s916, 1

</llo_original>
